<compile_context>
chip_gen: v7x
topology: tpu7x:2x2x1
jax: 0.10.0
libtpu: 0.0.40
codegen_flags: <defaults>
</compile_context>

<pallas_src>
import functools
import math
from typing import NamedTuple

import jax
import jax.numpy as jnp
import numpy as np
from jax.experimental import pallas as pl
from jax.experimental.pallas import tpu as pltpu

BN_EPS = 1e-5
_MIB = 1024 * 1024


def _round_up(x, m):
    return (x + m - 1) // m * m


def _pick_tk(k_pad, desired):
    """Largest multiple of 128 <= desired that divides k_pad (k_pad % 128 == 0)."""
    tk = max(128, min(desired, k_pad))
    tk = (tk // 128) * 128
    while k_pad % tk:
        tk -= 128
    return tk


def _vmem_limit(buffer_bytes, headroom=4 * _MIB):
    # Never below the default scoped limit; stay well under physical VMEM.
    return int(min(max(buffer_bytes + headroom, 32 * _MIB), 100 * _MIB))


class DenseParams(NamedTuple):
    weight: jax.Array        # (K_pad, M_pad), compute dtype, zero padded
    scale_shift: jax.Array   # (2, M_pad) f32: row 0 = scale, row 1 = shift
    in_features: int
    out_features: int


# ----------------------------------------------------------------------------
# Kernels
# ----------------------------------------------------------------------------
def _dense_kernel_resident(x_ref, w_ref, ss_ref, out_ref, *, residual,
                           compute_dtype):
    """One row tile; weight fully VMEM-resident (already in compute dtype)."""
    x = x_ref[...]                                            # (TM, K_pad)
    xc = x if x.dtype == compute_dtype else x.astype(compute_dtype)
    y = jnp.dot(xc, w_ref[...], preferred_element_type=jnp.float32)
    y = y * ss_ref[0:1, :] + ss_ref[1:2, :]                   # folded eval BN
    if residual:                                              # static branch
        y = y + x.astype(jnp.float32)                         # f32 residual
    out_ref[...] = y.astype(out_ref.dtype)


def _dense_kernel_ktiled(*refs, residual, compute_dtype):
    """Row tile x K tile; f32 accumulator, BN + residual at the last K step."""
    if residual:
        x_ref, w_ref, ss_ref, xres_ref, out_ref, acc_ref = refs
    else:
        x_ref, w_ref, ss_ref, out_ref, acc_ref = refs
    k = pl.program_id(1)

    @pl.when(k == 0)
    def _():
        acc_ref[...] = jnp.zeros_like(acc_ref)

    x = x_ref[...]
    if x.dtype != compute_dtype:
        x = x.astype(compute_dtype)
    acc_ref[...] += jnp.dot(x, w_ref[...], preferred_element_type=jnp.float32)

    @pl.when(k == pl.num_programs(1) - 1)
    def _():
        y = acc_ref[...] * ss_ref[0:1, :] + ss_ref[1:2, :]
        if residual:
            y = y + xres_ref[...].astype(jnp.float32)
        out_ref[...] = y.astype(out_ref.dtype)


# ----------------------------------------------------------------------------
# Parameter preparation (hoist to model init; cache & reuse across forwards)
# ----------------------------------------------------------------------------
def prepare_dense_params(weight, bn_gamma=None, bn_beta=None, bn_mean=None,
                         bn_var=None, *, bias="bn",
                         compute_dtype=jnp.float32):
    """Fold eval-mode BN to an affine scale/shift, pad feature dims to
    multiples of 128 (lane-dense) and pre-cast the weight to the MXU compute
    dtype. Do this once per module, not per forward."""
    K, M = weight.shape
    if bias == "bn":
        scale = (bn_gamma / jnp.sqrt(bn_var + BN_EPS)).astype(jnp.float32)
        shift = (bn_beta - bn_mean * scale).astype(jnp.float32)
    else:                                   # bias is identity
        scale = jnp.ones((M,), jnp.float32)
        shift = jnp.zeros((M,), jnp.float32)

    K_pad, M_pad = _round_up(K, 128), _round_up(M, 128)
    w_p = weight
    if (K_pad, M_pad) != (K, M):
        w_p = jnp.pad(weight, ((0, K_pad - K), (0, M_pad - M)))
    w_p = w_p.astype(compute_dtype)
    # padded output channels: scale=1, shift=0 keeps them exactly zero
    ss = jnp.stack([jnp.pad(scale, (0, M_pad - M), constant_values=1.0),
                    jnp.pad(shift, (0, M_pad - M))])          # (2, M_pad)
    return DenseParams(w_p, ss, K, M)


# ----------------------------------------------------------------------------
# Forward
# ----------------------------------------------------------------------------
def dense_forward_prepared(x, params, *, tile_rows=512,
                           weight_vmem_budget_bytes=24 * _MIB,
                           out_dtype=None):
    N, K = x.shape
    assert K == params.in_features, (K, params.in_features)
    M = params.out_features
    w_p, ss_p = params.weight, params.scale_shift
    K_pad, M_pad = w_p.shape
    compute_dtype = w_p.dtype
    residual = (K == M)                    # module adds input when in == out
    out_dtype = x.dtype if out_dtype is None else out_dtype

    # Row tile: multiple of 8, capped so the "parallel" row axis has >= 2
    # grid steps (v7x megacore sharding).
    tm = min(tile_rows, _round_up(N, 8))
    if N > 8:
        tm = min(tm, _round_up(-(-N // 2), 8))
    N_pad = _round_up(N, tm)

    x_p = x
    if (N_pad, K_pad) != (N, K):
        x_p = jnp.pad(x, ((0, N_pad - N), (0, K_pad - K)))

    x_isz = jnp.dtype(x.dtype).itemsize
    w_isz = jnp.dtype(compute_dtype).itemsize
    o_isz = jnp.dtype(out_dtype).itemsize
    w_total_bytes = K_pad * M_pad * w_isz

    if w_total_bytes <= weight_vmem_budget_bytes:
        # -------- resident-weight path: grid over rows only ----------------
        vmem = (w_total_bytes                      # weight (single-buffered)
                + 2 * M_pad * 4                    # scale/shift
                + 2 * tm * K_pad * x_isz           # x tile (double-buffered)
                + 2 * tm * M_pad * o_isz)          # out tile (double-buffered)
        out_p = pl.pallas_call(
            functools.partial(_dense_kernel_resident, residual=residual,
                              compute_dtype=compute_dtype),
            out_shape=jax.ShapeDtypeStruct((N_pad, M_pad), out_dtype),
            grid=(N_pad // tm,),
            in_specs=[
                pl.BlockSpec((tm, K_pad), lambda i: (i, 0)),
                pl.BlockSpec((K_pad, M_pad), lambda i: (0, 0),
                             pipeline_mode=pl.Buffered(1)),   # never re-DMAs
                pl.BlockSpec((2, M_pad), lambda i: (0, 0),
                             pipeline_mode=pl.Buffered(1)),
            ],
            out_specs=pl.BlockSpec((tm, M_pad), lambda i: (i, 0)),
            compiler_params=pltpu.CompilerParams(
                dimension_semantics=("parallel",),
                vmem_limit_bytes=_vmem_limit(vmem)),
        )(x_p, w_p, ss_p)
    else:
        # -------- K-tiled fallback (v7x: weight too big per TensorCore) ----
        tk_desired = max(128, (weight_vmem_budget_bytes
                               // (2 * M_pad * w_isz)) // 128 * 128)
        tk = _pick_tk(K_pad, tk_desired)
        vmem = (2 * tk * M_pad * w_isz             # weight K-slab (dbl-buf)
                + 2 * tm * tk * x_isz              # x tile (dbl-buf)
                + tm * M_pad * 4                   # f32 accumulator
                + 2 * tm * M_pad * o_isz           # out tile
                + 2 * M_pad * 4)                   # scale/shift
        in_specs = [
            pl.BlockSpec((tm, tk), lambda i, k: (i, k)),
            pl.BlockSpec((tk, M_pad), lambda i, k: (k, 0)),
            pl.BlockSpec((2, M_pad), lambda i, k: (0, 0),
                         pipeline_mode=pl.Buffered(1)),
        ]
        operands = [x_p, w_p, ss_p]
        if residual:
            # full-width x, read only at the last K step (constant over k)
            in_specs.append(pl.BlockSpec((tm, K_pad), lambda i, k: (i, 0)))
            operands.append(x_p)
            vmem += 2 * tm * K_pad * x_isz
        out_p = pl.pallas_call(
            functools.partial(_dense_kernel_ktiled, residual=residual,
                              compute_dtype=compute_dtype),
            out_shape=jax.ShapeDtypeStruct((N_pad, M_pad), out_dtype),
            grid=(N_pad // tm, K_pad // tk),
            in_specs=in_specs,
            out_specs=pl.BlockSpec((tm, M_pad), lambda i, k: (i, 0)),
            scratch_shapes=[pltpu.VMEM((tm, M_pad), jnp.float32)],
            compiler_params=pltpu.CompilerParams(
                dimension_semantics=("parallel", "arbitrary"),
                vmem_limit_bytes=_vmem_limit(vmem)),
        )(*operands)

    if (N_pad, M_pad) == (N, M):
        return out_p
    return out_p[:N, :M]


def dense_forward(x, weight, bn_gamma=None, bn_beta=None, bn_mean=None,
                  bn_var=None, *, bias="bn", compute_dtype=jnp.float32,
                  **kwargs):
    """Convenience wrapper: prepares (pads / folds / casts) params per call.
    For repeated forwards, call prepare_dense_params() once instead."""
    params = prepare_dense_params(weight, bn_gamma, bn_beta, bn_mean, bn_var,
                                  bias=bias, compute_dtype=compute_dtype)
    return dense_forward_prepared(x, params, **kwargs)


# ----------------------------------------------------------------------------
# Pure-JAX reference (mirrors PyTorch Dense.forward in eval mode)
# ----------------------------------------------------------------------------
def reference_dense(x, weight, bn_gamma=None, bn_beta=None, bn_mean=None,
                    bn_var=None, *, bias="bn"):
    y = x @ weight
    if bias == "bn":
        y = (y - bn_mean) / jnp.sqrt(bn_var + BN_EPS) * bn_gamma + bn_beta
    if x.shape[1] == weight.shape[1]:
        y = y + x
    return y


# ----------------------------------------------------------------------------
if __name__ == "__main__":
    key = jax.random.PRNGKey(0)
    ks = jax.random.split(key, 12)

    def dense_weight(k, in_f, out_f):
        # matches Dense.reset_parameters(): uniform(-1/sqrt(out), 1/sqrt(out))
        stdv = 1.0 / math.sqrt(out_f)
        return jax.random.uniform(k, (in_f, out_f), jnp.float32, -stdv, stdv)

    def check(out, ref, name, atol=1e-5, rtol=1e-5):
        out = np.asarray(jax.block_until_ready(out))
        ref = np.asarray(ref)
        assert out.shape == ref.shape, (name, out.shape, ref.shape)
        err = float(np.max(np.abs(out - ref)))
        assert np.allclose(out, ref, atol=atol, rtol=rtol), (
            "%s mismatch: max abs err = %g" % (name, err))

    # ---- Case 1: in == out (residual path), bias='bn', non-trivial BN stats
    N1, FI1, FO1 = 64, 32, 32
    x1 = jax.random.normal(ks[0], (N1, FI1), jnp.float32)
    W1 = dense_weight(ks[1], FI1, FO1)
    g1 = jax.random.uniform(ks[2], (FO1,), jnp.float32, 0.5, 1.5)
    b1 = 0.1 * jax.random.normal(ks[3], (FO1,), jnp.float32)
    m1 = 0.1 * jax.random.normal(ks[4], (FO1,), jnp.float32)
    v1 = jax.random.uniform(ks[5], (FO1,), jnp.float32, 0.5, 1.5)
    ref1 = reference_dense(x1, W1, g1, b1, m1, v1)
    check(dense_forward(x1, W1, g1, b1, m1, v1), ref1, "case1")

    # ---- Case 2: in != out (no residual), bias='bn'
    N2, FI2, FO2 = 48, 24, 40
    x2 = jax.random.normal(ks[6], (N2, FI2), jnp.float32)
    W2 = dense_weight(ks[7], FI2, FO2)
    g2 = jax.random.uniform(ks[8], (FO2,), jnp.float32, 0.5, 1.5)
    b2 = 0.1 * jax.random.normal(ks[9], (FO2,), jnp.float32)
    m2 = 0.1 * jax.random.normal(ks[10], (FO2,), jnp.float32)
    v2 = jax.random.uniform(ks[11], (FO2,), jnp.float32, 0.5, 1.5)
    ref2 = reference_dense(x2, W2, g2, b2, m2, v2)
    check(dense_forward(x2, W2, g2, b2, m2, v2), ref2, "case2")

    # ---- Case 3: bias != 'bn' (identity bias), residual path
    check(dense_forward(x1, W1, bias="none"),
          reference_dense(x1, W1, bias="none"), "case3")

    # ---- Case 4: bf16 MXU operands (weight pre-cast in wrapper), f32 acc
    check(dense_forward(x1, W1, g1, b1, m1, v1, compute_dtype=jnp.bfloat16),
          ref1, "case4_bf16", atol=3e-2, rtol=3e-2)

    # ---- Case 5: force the K-tiled fallback path (budget=0) on both branches
    check(dense_forward(x1, W1, g1, b1, m1, v1, weight_vmem_budget_bytes=0),
          ref1, "case5_ktiled_residual")
    check(dense_forward(x2, W2, g2, b2, m2, v2, weight_vmem_budget_bytes=0),
          ref2, "case5_ktiled_noresidual")

    # ---- Case 6: hoisted params (prepare once, reuse across forwards)
    p1 = prepare_dense_params(W1, g1, b1, m1, v1, bias="bn")
    check(dense_forward_prepared(x1, p1), ref1, "case6a_prepared")
    check(dense_forward_prepared(x1[:40], p1),
          reference_dense(x1[:40], W1, g1, b1, m1, v1), "case6b_prepared")

    print("KERNEL_OK")
</pallas_src>

<mosaic_0001>
module attributes {stable_mosaic.version = 11 : i64} {
  func.func @_dense_kernel_resident(%arg0: i32, %arg1: memref<32x128xf32, #tpu.memory_space<vmem>>, %arg2: memref<128x128xf32, #tpu.memory_space<vmem>>, %arg3: memref<2x128xf32, #tpu.memory_space<vmem>>, %arg4: memref<32x128xf32, #tpu.memory_space<vmem>>) attributes {dimension_semantics = [#tpu.dimension_semantics<parallel>], iteration_bounds = array<i64: 2>, scalar_prefetch = 0 : i64, scratch_operands = 0 : i64, tpu.core_type = #tpu.core_type<tc>, window_params = [{transform_indices = @transform_0, window_bounds = array<i64: 32, 128>}, {pipeline_mode = #tpu.pipeline_mode<synchronous>, transform_indices = @transform_1, window_bounds = array<i64: 128, 128>}, {pipeline_mode = #tpu.pipeline_mode<synchronous>, transform_indices = @transform_2, window_bounds = array<i64: 2, 128>}, {transform_indices = @transform_3, window_bounds = array<i64: 32, 128>}]} {
    %c0 = arith.constant 0 : index
    %c0_0 = arith.constant 0 : index
    %0 = vector.load %arg1[%c0, %c0_0] : memref<32x128xf32, #tpu.memory_space<vmem>>, vector<32x128xf32>
    %c0_1 = arith.constant 0 : index
    %c0_2 = arith.constant 0 : index
    %1 = vector.load %arg2[%c0_1, %c0_2] : memref<128x128xf32, #tpu.memory_space<vmem>>, vector<128x128xf32>
    %cst = arith.constant dense<0.000000e+00> : vector<32x128xf32>
    %2 = tpu.matmul %0, %1, %cst {dimension_numbers = #tpu.dot_dimension_numbers<[1], [0], [0], [1], [0, 0, 1, 1], [], []>} : vector<32x128xf32>, vector<128x128xf32>, vector<32x128xf32> -> vector<32x128xf32>
    %c0_3 = arith.constant 0 : index
    %c0_4 = arith.constant 0 : index
    %3 = vector.load %arg3[%c0_3, %c0_4] : memref<2x128xf32, #tpu.memory_space<vmem>>, vector<1x128xf32>
    %4 = vector.broadcast %3 : vector<1x128xf32> to vector<32x128xf32>
    %5 = arith.mulf %2, %4 : vector<32x128xf32>
    %c1 = arith.constant 1 : index
    %c0_5 = arith.constant 0 : index
    %6 = vector.load %arg3[%c1, %c0_5] : memref<2x128xf32, #tpu.memory_space<vmem>>, vector<1x128xf32>
    %7 = vector.broadcast %6 : vector<1x128xf32> to vector<32x128xf32>
    %8 = arith.addf %5, %7 : vector<32x128xf32>
    %9 = arith.addf %8, %0 : vector<32x128xf32>
    %c0_6 = arith.constant 0 : index
    %c0_7 = arith.constant 0 : index
    %10 = vector.load %arg4[%c0_6, %c0_7] : memref<32x128xf32, #tpu.memory_space<vmem>>, vector<32x128xf32>
    tpu.vector_store %arg4[%c0_6, %c0_7], %9 {strides = array<i32>} : memref<32x128xf32, #tpu.memory_space<vmem>>, vector<32x128xf32>,
    return
  }
  func.func @transform_0(%arg0: i32) -> (i32, i32) {
    %c0_i32 = arith.constant 0 : i32
    %c0_i32_0 = arith.constant 0 : i32
    return %arg0, %c0_i32 : i32, i32
  }
  func.func @transform_1(%arg0: i32) -> (i32, i32) {
    %c0_i32 = arith.constant 0 : i32
    %c0_i32_0 = arith.constant 0 : i32
    %c0_i32_1 = arith.constant 0 : i32
    return %c0_i32, %c0_i32_0 : i32, i32
  }
  func.func @transform_2(%arg0: i32) -> (i32, i32) {
    %c0_i32 = arith.constant 0 : i32
    %c0_i32_0 = arith.constant 0 : i32
    %c0_i32_1 = arith.constant 0 : i32
    return %c0_i32, %c0_i32_0 : i32, i32
  }
  func.func @transform_3(%arg0: i32) -> (i32, i32) {
    %c0_i32 = arith.constant 0 : i32
    %c0_i32_0 = arith.constant 0 : i32
    return %arg0, %c0_i32 : i32, i32
  }
}

</mosaic_0001>

<llo_original>
// kernel: tpu_custom_call.1
$region0: #{tpu_custom_call.1}
  #allocation0 [shape = 'u32[]', space=smem, size = 0x4, offset = 0x4, fixed_abs, tag = 'smem constant byte address 0x4 - core index']
  #allocation1 [shape = 'u32[144,128]{1,0:T(1,128)}', space=vmem, size = 0x12000, scoped, tag = 'internal scratch']
  %s0 = inlined_call_operand.hbm [shape: f32[64,128], index: 0, kind: input, shape index: {}]
  %s1 = inlined_call_operand.hbm [shape: f32[128,128], index: 1, kind: input, shape index: {}]
  %s2 = inlined_call_operand.vmem [shape: f32[2,128], index: 2, kind: input, shape index: {}]
  %s3 = inlined_call_operand.hbm [shape: f32[64,128], index: 3, kind: output, shape index: {}]
  %s4 = sld [smem:[#allocation0]]
  $region53: #{tpu_custom_call.1} parent=0
    _
  %s6 = ssub.s32 1, %s4
  %s7 = scalar_select 0, %s6, %s4
  $region1: #{tpu_custom_call.1} parent=0
    #allocation2 [shape = 'u8[32768]{0}', space=vmem, size = 0x8000, scoped, tag = 'input window, operand 0']
    #allocation3 [shape = 's32[2]{0}', space=sflag, size = 0x8, scoped, tag = 'scoped memory for tpu_custom_call.1']
    #allocation4 [shape = 's32[2]{0}', space=sflag, size = 0x8, scoped, tag = 'scoped memory for tpu_custom_call.1']
    #allocation5 [shape = 'u8[65536]{0}', space=vmem, size = 0x10000, scoped, tag = 'input window, operand 1, single buffered']
    #allocation6 [shape = 's32[1]{0}', space=sflag, size = 0x4, scoped, tag = 'scoped memory for tpu_custom_call.1']
    #allocation7 [shape = 'u8[32768]{0}', space=vmem, size = 0x8000, scoped, tag = 'output window, operand 0']
    %8 = vsyncpa [#allocation3], 0
    %s9 = scalar_lea.sflag [#allocation3], 1
    %10 = vsyncpa %s9, 0
    %11 = vsyncpa [#allocation6], 0
    %12 = vsyncpa [#allocation4], 0
    %s13 = scalar_lea.sflag [#allocation4], 1
    %14 = vsyncpa %s13, 0
    loop: start=0, step=1, limit=4
    $region2: #{tpu_custom_call.1} parent=1 // loop_pre_header
      _
    $region3: #{tpu_custom_call.1} parent=1 // loop_header
      %s16 = sphi 0, %s20
      %p17 = scmp.ge.s32.totalorder %s16, 4
      %s26 = sphi 0, %s28
      %s29 = sphi 0, %s26
      %s30 = sphi 0, %s29
      %s46 = sphi 0, %s30
      %s50 = sphi 0, %s50
      %s52 = sphi 0, %s50
      %s53 = sphi 0, %s52
      %s67 = sphi 0, %s53
      %s71 = sphi 0, %s71
      %s73 = sphi 0, %s71
      %s74 = sphi 0, %s73
      %s88 = sphi 0, %s74
      %s94 = sphi 0, %s96
      %s97 = sphi 0, %s94
      %s98 = sphi 0, %s97
      %s114 = sphi 0, %s98
    $region4: #{tpu_custom_call.1} parent=1 // loop_header_branch
      %19 = sbr.rel (%p17) target = $region8
    $region5: #{tpu_custom_call.1} parent=1 // loop_body
      %s21 = ssub.s32 %s16, 1
      %s22 = ssub.s32 %s16, 2
      %s23 = sadd.s32 %s16, 1
      %s24 = ssub.s32 %s16, %s23
      %p25 = scmp.eq.s32.totalorder %s24, 0
      %s27 = sadd.s32 %s26, 1
      %s28 = scalar_select %p25, %s26, %s27
      %p31 = pneg %p25
      %p32 = scmp.eq.s32.totalorder %s16, 1
      %p33 = por %p31, %p32
      %p34 = scmp.ne.s32.totalorder %s26, %s29
      %p35 = scmp.eq.s32.totalorder %s16, 0
      %p36 = por %p34, %p35
      %p37 = scmp.ne.s32.totalorder %s26, %s29
      %p38 = scmp.eq.s32.totalorder %s21, 1
      %p39 = por %p37, %p38
      %p40 = scmp.ne.s32.totalorder %s29, %s30
      %p41 = scmp.eq.s32.totalorder %s21, 0
      %p42 = por %p40, %p41
      %p43 = scmp.ne.s32.totalorder %s29, %s30
      %p44 = scmp.eq.s32.totalorder %s22, 1
      %p45 = por %p43, %p44
      %p47 = scmp.ne.s32.totalorder %s30, %s46
      %p48 = scmp.eq.s32.totalorder %s22, 0
      %p49 = por %p47, %p48
      %s51 = sadd.s32 %s50, 1
      %p54 = scmp.eq.s32.totalorder %s16, 1
      %p55 = scmp.ne.s32.totalorder %s50, %s52
      %p56 = scmp.eq.s32.totalorder %s16, 0
      %p57 = por %p55, %p56
      %p58 = scmp.ne.s32.totalorder %s50, %s52
      %p59 = scmp.eq.s32.totalorder %s21, 1
      %p60 = por %p58, %p59
      %p61 = scmp.ne.s32.totalorder %s52, %s53
      %p62 = scmp.eq.s32.totalorder %s21, 0
      %p63 = por %p61, %p62
      %p64 = scmp.ne.s32.totalorder %s52, %s53
      %p65 = scmp.eq.s32.totalorder %s22, 1
      %p66 = por %p64, %p65
      %p68 = scmp.ne.s32.totalorder %s53, %s67
      %p69 = scmp.eq.s32.totalorder %s22, 0
      %p70 = por %p68, %p69
      %s72 = sadd.s32 %s71, 1
      %p75 = scmp.eq.s32.totalorder %s16, 1
      %p76 = scmp.ne.s32.totalorder %s71, %s73
      %p77 = scmp.eq.s32.totalorder %s16, 0
      %p78 = por %p76, %p77
      %p79 = scmp.ne.s32.totalorder %s71, %s73
      %p80 = scmp.eq.s32.totalorder %s21, 1
      %p81 = por %p79, %p80
      %p82 = scmp.ne.s32.totalorder %s73, %s74
      %p83 = scmp.eq.s32.totalorder %s21, 0
      %p84 = por %p82, %p83
      %p85 = scmp.ne.s32.totalorder %s73, %s74
      %p86 = scmp.eq.s32.totalorder %s22, 1
      %p87 = por %p85, %p86
      %p89 = scmp.ne.s32.totalorder %s74, %s88
      %p90 = scmp.eq.s32.totalorder %s22, 0
      %p91 = por %p89, %p90
      %s92 = ssub.s32 %s16, %s23
      %p93 = scmp.eq.s32.totalorder %s92, 0
      %s95 = sadd.s32 %s94, 1
      %s96 = scalar_select %p93, %s94, %s95
      %p99 = pneg %p93
      %p100 = scmp.eq.s32.totalorder %s16, 1
      %p101 = por %p99, %p100
      %p102 = scmp.ne.s32.totalorder %s94, %s97
      %p103 = scmp.eq.s32.totalorder %s16, 0
      %p104 = por %p102, %p103
      %p105 = scmp.ne.s32.totalorder %s94, %s97
      %p106 = scmp.eq.s32.totalorder %s21, 1
      %p107 = por %p105, %p106
      %p108 = scmp.ne.s32.totalorder %s97, %s98
      %p109 = scmp.eq.s32.totalorder %s21, 0
      %p110 = por %p108, %p109
      %p111 = scmp.ne.s32.totalorder %s97, %s98
      %p112 = scmp.eq.s32.totalorder %s22, 1
      %p113 = por %p111, %p112
      %p115 = scmp.ne.s32.totalorder %s98, %s114
      %p116 = scmp.eq.s32.totalorder %s22, 0
      %p117 = por %p115, %p116
      %p118 = scmp.le.s32.totalorder 1, %s16
      %p119 = scmp.lt.s32.totalorder %s16, 3
      %p120 = pnand %p118, %p119
      %p121 = pneg %p120
      // Predicated region
      $region9: #{tpu_custom_call.1} parent=5 // pred_check
        _
      $region10: #{tpu_custom_call.1} parent=5 // pred_check_branch
        %123 = sbr.rel (%p120) target = $region12
      $region11: #{tpu_custom_call.1} parent=5 // pred_region
        %s124 = ssub.s32 %s16, 1
        // Predicated region
        $region13: #{tpu_custom_call.1} parent=11 // pred_check
          %p125 = pneg %p63
        $region14: #{tpu_custom_call.1} parent=11 // pred_check_branch
          %127 = sbr.rel (%p125) target = $region16
        $region15: #{tpu_custom_call.1} parent=11 // pred_region
          %s129 = ssub.s32 2048, 2048
          %130 = vsyncadd [#allocation6], %s129
          %s131 = sshll.u32 [#allocation5], 4
          %s132 = int_to_ptr.vmem [resolvable:$true] %s131
          %137 = dma.hbm_to_vmem [thread:$0]  %s1, 2048, %s132, [#allocation6], 128, 128, 8
        $region16: #{tpu_custom_call.1} parent=11 // pred_fallthru
          _
        // Predicated region
        $region17: #{tpu_custom_call.1} parent=11 // pred_check
          %p138 = pneg %p84
        $region18: #{tpu_custom_call.1} parent=11 // pred_check_branch
          %140 = sbr.rel (%p138) target = $region20
        $region19: #{tpu_custom_call.1} parent=11 // pred_region
          _
        $region20: #{tpu_custom_call.1} parent=11 // pred_fallthru
          _
      $region12: #{tpu_custom_call.1} parent=5 // pred_fallthru
        _
      %p141 = scmp.lt.s32.totalorder %s16, 2
      // Predicated region
      $region21: #{tpu_custom_call.1} parent=5 // pred_check
        %p142 = pneg %p141
      $region22: #{tpu_custom_call.1} parent=5 // pred_check_branch
        %144 = sbr.rel (%p142) target = $region24
      $region23: #{tpu_custom_call.1} parent=5 // pred_region
        // Predicated region
        $region25: #{tpu_custom_call.1} parent=23 // pred_check
          %p145 = pneg %p36
        $region26: #{tpu_custom_call.1} parent=23 // pred_check_branch
          %147 = sbr.rel (%p145) target = $region28
        $region27: #{tpu_custom_call.1} parent=23 // pred_region
          %s148 = sand.u32 %s26, 1
          %s149 = scalar_lea.sflag [#allocation3], %s148
          %s150 = sand.u32 %s26, 1
          %s151 = smul.addr %s150, 32
          %s152 = scalar_lea.vmem [#allocation2], %s151
          %s153 = smul.u32 4, %s16
          %s155 = ssub.s32 512, 512
          %156 = vsyncadd %s149, %s155
          %s157 = smul.addr %s153, 128
          %s158 = scalar_lea.hbm %s0, %s157
          %s159 = sshll.u32 %s152, 4
          %s160 = int_to_ptr.vmem [resolvable:$true] %s159
          %165 = dma.hbm_to_vmem [thread:$0]  %s158, 512, %s160, %s149, 128, 128, 8
        $region28: #{tpu_custom_call.1} parent=23 // pred_fallthru
          _
      $region24: #{tpu_custom_call.1} parent=5 // pred_fallthru
        _
      %p166 = scmp.le.s32.totalorder 1, %s16
      %p167 = scmp.lt.s32.totalorder %s16, 3
      %p168 = pnand %p166, %p167
      %p169 = pneg %p168
      // Predicated region
      $region29: #{tpu_custom_call.1} parent=5 // pred_check
        _
      $region30: #{tpu_custom_call.1} parent=5 // pred_check_branch
        %171 = sbr.rel (%p168) target = $region32
      $region31: #{tpu_custom_call.1} parent=5 // pred_region
        %s172 = ssub.s32 %s16, 1
        %s173 = sand.u32 %s29, 1
        %s174 = scalar_lea.sflag [#allocation3], %s173
        %s175 = sand.u32 %s29, 1
        %s176 = smul.addr %s175, 32
        %s177 = scalar_lea.vmem [#allocation2], %s176
        // Predicated region
        $region33: #{tpu_custom_call.1} parent=31 // pred_check
          %p178 = pneg %p42
        $region34: #{tpu_custom_call.1} parent=31 // pred_check_branch
          %180 = sbr.rel (%p178) target = $region36
        $region35: #{tpu_custom_call.1} parent=31 // pred_region
          %181 = dma.done %s174, 512
        $region36: #{tpu_custom_call.1} parent=31 // pred_fallthru
          _
        // Predicated region
        $region37: #{tpu_custom_call.1} parent=31 // pred_check
          %p182 = pneg %p63
        $region38: #{tpu_custom_call.1} parent=31 // pred_check_branch
          %184 = sbr.rel (%p182) target = $region40
        $region39: #{tpu_custom_call.1} parent=31 // pred_region
          %185 = dma.done [#allocation6], 2048
        $region40: #{tpu_custom_call.1} parent=31 // pred_fallthru
          _
        %s186 = sand.u32 %s29, 1
        %s187 = scalar_lea.sflag [#allocation3], %s186
        %s188 = sand.u32 %s29, 1
        %s189 = smul.addr %s188, 32
        %s190 = scalar_lea.vmem [#allocation2], %s189
        %p191 = pneg %p42
        %p192 = pneg %p39
        %p193 = pneg %p63
        %p194 = pneg %p60
        %p195 = pneg %p84
        %p196 = pneg %p81
        %p197 = pneg %p110
        %p198 = pneg %p107
        %s199 = sand.u32 %s97, 1
        %s200 = scalar_lea.sflag [#allocation4], %s199
        %s201 = sand.u32 %s97, 1
        %s202 = smul.addr %s201, 32
        %s203 = scalar_lea.vmem [#allocation7], %s202
        %s204 = smul.u32 4, %s21
        %s205 = smul.u32 4, %s21
        %v206 = vld [vmem:[%s177] sm:$0xff]
        %v207 = vld [vmem:[%s177 + $0x8] sm:$0xff]
        %v208 = vld [vmem:[%s177 + $0x10] sm:$0xff]
        %v209 = vld [vmem:[%s177 + $0x18] sm:$0xff]
        %v210 = vld [vmem:[#allocation5] sm:$0xff]
        %v211 = vld [vmem:[#allocation5 + $0x8] sm:$0xff]
        %v212 = vld [vmem:[#allocation5 + $0x10] sm:$0xff]
        %v213 = vld [vmem:[#allocation5 + $0x18] sm:$0xff]
        %v214 = vld [vmem:[#allocation5 + $0x20] sm:$0xff]
        %v215 = vld [vmem:[#allocation5 + $0x28] sm:$0xff]
        %v216 = vld [vmem:[#allocation5 + $0x30] sm:$0xff]
        %v217 = vld [vmem:[#allocation5 + $0x38] sm:$0xff]
        %v218 = vld [vmem:[#allocation5 + $0x40] sm:$0xff]
        %v219 = vld [vmem:[#allocation5 + $0x48] sm:$0xff]
        %v220 = vld [vmem:[#allocation5 + $0x50] sm:$0xff]
        %v221 = vld [vmem:[#allocation5 + $0x58] sm:$0xff]
        %v222 = vld [vmem:[#allocation5 + $0x60] sm:$0xff]
        %v223 = vld [vmem:[#allocation5 + $0x68] sm:$0xff]
        %v224 = vld [vmem:[#allocation5 + $0x70] sm:$0xff]
        %v225 = vld [vmem:[#allocation5 + $0x78] sm:$0xff]
        %226 = vmatprep.subr.mxu0 0.0
        %227 = vmatpush1.msra.mxu0 %v210
        %228 = vmatprep.subr.mxu0 0.0
        %229 = vmatpush1.msra.mxu0 %v211
        %230 = vmatprep.subr.mxu0 0.0
        %231 = vmatpush1.msra.mxu0 %v212
        %232 = vmatprep.subr.mxu0 0.0
        %233 = vmatpush1.msra.mxu0 %v213
        %234 = vmatprep.subr.mxu0 0.0
        %235 = vmatpush1.msra.mxu0 %v214
        %236 = vmatprep.subr.mxu0 0.0
        %237 = vmatpush1.msra.mxu0 %v215
        %238 = vmatprep.subr.mxu0 0.0
        %239 = vmatpush1.msra.mxu0 %v216
        %240 = vmatprep.subr.mxu0 0.0
        %241 = vmatpush1.msra.mxu0 %v217
        %242 = vmatprep.subr.mxu0 0.0
        %243 = vmatpush1.msra.mxu0 %v218
        %244 = vmatprep.subr.mxu0 0.0
        %245 = vmatpush1.msra.mxu0 %v219
        %246 = vmatprep.subr.mxu0 0.0
        %247 = vmatpush1.msra.mxu0 %v220
        %248 = vmatprep.subr.mxu0 0.0
        %249 = vmatpush1.msra.mxu0 %v221
        %250 = vmatprep.subr.mxu0 0.0
        %251 = vmatpush1.msra.mxu0 %v222
        %252 = vmatprep.subr.mxu0 0.0
        %253 = vmatpush1.msra.mxu0 %v223
        %254 = vmatprep.subr.mxu0 0.0
        %255 = vmatpush1.msra.mxu0 %v224
        %256 = vmatprep.subr.mxu0 0.0
        %257 = vmatpush1.msra.mxu0 %v225
        %258 = vmatprep.subr.mxu0 0.0
        %259 = vmatpush1.msra.mxu0 0.0
        %260 = vmatprep.subr.mxu0 0.0
        %261 = vmatpush1.msra.mxu0 0.0
        %262 = vmatprep.subr.mxu0 0.0
        %263 = vmatpush1.msra.mxu0 0.0
        %264 = vmatprep.subr.mxu0 0.0
        %265 = vmatpush1.msra.mxu0 0.0
        %266 = vmatprep.subr.mxu0 0.0
        %267 = vmatpush1.msra.mxu0 0.0
        %268 = vmatprep.subr.mxu0 0.0
        %269 = vmatpush1.msra.mxu0 0.0
        %270 = vmatprep.subr.mxu0 0.0
        %271 = vmatpush1.msra.mxu0 0.0
        %272 = vmatprep.subr.mxu0 0.0
        %273 = vmatpush1.msra.mxu0 0.0
        %274 = vmatprep.subr.mxu0 0.0
        %275 = vmatpush1.msra.mxu0 0.0
        %276 = vmatprep.subr.mxu0 0.0
        %277 = vmatpush1.msra.mxu0 0.0
        %278 = vmatprep.subr.mxu0 0.0
        %279 = vmatpush1.msra.mxu0 0.0
        %280 = vmatprep.subr.mxu0 0.0
        %281 = vmatpush1.msra.mxu0 0.0
        %282 = vmatprep.subr.mxu0 0.0
        %283 = vmatpush1.msra.mxu0 0.0
        %284 = vmatprep.subr.mxu0 0.0
        %285 = vmatpush1.msra.mxu0 0.0
        %286 = vmatprep.subr.mxu0 0.0
        %287 = vmatpush1.msra.mxu0 0.0
        %288 = vmatprep.subr.mxu0 0.0
        %289 = vmatpush1.msra.mxu0 0.0
        %290 = vmatprep.mubr.f32.mxu0 0.0
        %291 = vmatmul.mubr.f32.gmra.mrb[0].mxu0 %v206
        %v292 = vpop.f32.mrb[0].mxu0
        %v293 = vadd.f32 0.0, %v292
        %v294 = vpop.f32.mrb[0].mxu0
        %295 = vmatprep.mubr.f32.mxu0 0.0
        %296 = vmatmul.mubr.f32.gmra.mrb[0].mxu0 %v207
        %v297 = vpop.f32.mrb[0].mxu0
        %v298 = vadd.f32 0.0, %v297
        %v299 = vpop.f32.mrb[0].mxu0
        %300 = vmatprep.mubr.f32.mxu0 0.0
        %301 = vmatmul.mubr.f32.gmra.mrb[0].mxu0 %v208
        %v302 = vpop.f32.mrb[0].mxu0
        %v303 = vadd.f32 0.0, %v302
        %v304 = vpop.f32.mrb[0].mxu0
        %305 = vmatprep.mubr.f32.mxu0 0.0
        %306 = vmatmul.mubr.f32.gmra.mrb[0].mxu0 %v209
        %v307 = vpop.f32.mrb[0].mxu0
        %v308 = vadd.f32 0.0, %v307
        %v309 = vpop.f32.mrb[0].mxu0
        %310 = vdwg.mxu0
        %v311 = vld [vmem:[%s2] sm:$0x1]
        %v312 = vlaneseq
        %v313 = vshrl.u32 %v312, 7
        %v314 = vsub.s32 0, %v313
        %v315 = vrot.slane %v311, %v314
        %v316 = vmul.f32 %v293, %v315
        %v317 = vmul.f32 %v298, %v315
        %v318 = vmul.f32 %v303, %v315
        %v319 = vmul.f32 %v308, %v315
        %v320 = vld [vmem:[%s2 + $0x1] sm:$0x1]
        %v321 = vlaneseq
        %v322 = vshrl.u32 %v321, 7
        %v323 = vsub.s32 0, %v322
        %v324 = vrot.slane %v320, %v323
        %v325 = vadd.f32 %v316, %v324
        %v326 = vadd.f32 %v317, %v324
        %v327 = vadd.f32 %v318, %v324
        %v328 = vadd.f32 %v319, %v324
        %v329 = vadd.f32 %v325, %v206
        %v330 = vadd.f32 %v326, %v207
        %v331 = vadd.f32 %v327, %v208
        %v332 = vadd.f32 %v328, %v209
        %333 = vst [vmem:[%s203] sm:$0xff] %v329
        %334 = vst [vmem:[%s203 + $0x8] sm:$0xff] %v330
        %335 = vst [vmem:[%s203 + $0x10] sm:$0xff] %v331
        %336 = vst [vmem:[%s203 + $0x18] sm:$0xff] %v332
        %s337 = sand.u32 %s97, 1
        %s338 = scalar_lea.sflag [#allocation4], %s337
        %s339 = sand.u32 %s97, 1
        %s340 = smul.addr %s339, 32
        %s341 = scalar_lea.vmem [#allocation7], %s340
        // Predicated region
        $region41: #{tpu_custom_call.1} parent=31 // pred_check
          %p342 = pneg %p107
        $region42: #{tpu_custom_call.1} parent=31 // pred_check_branch
          %344 = sbr.rel (%p342) target = $region44
        $region43: #{tpu_custom_call.1} parent=31 // pred_region
          %s345 = smul.u32 4, %s21
          %s347 = ssub.s32 512, 512
          %348 = vsyncadd %s338, %s347
          %s349 = smul.addr %s345, 128
          %s350 = scalar_lea.hbm %s3, %s349
          %s351 = sshll.u32 %s341, 4
          %s352 = int_to_ptr.vmem [resolvable:$true] %s351
          %357 = dma.vmem_to_hbm [thread:$0]  %s352, 512, %s350, %s338, 128, 128, 8
        $region44: #{tpu_custom_call.1} parent=31 // pred_fallthru
          _
      $region32: #{tpu_custom_call.1} parent=5 // pred_fallthru
        _
      %p358 = scmp.le.s32.totalorder 2, %s16
      // Predicated region
      $region45: #{tpu_custom_call.1} parent=5 // pred_check
        %p359 = pneg %p358
      $region46: #{tpu_custom_call.1} parent=5 // pred_check_branch
        %361 = sbr.rel (%p359) target = $region48
      $region47: #{tpu_custom_call.1} parent=5 // pred_region
        %s362 = ssub.s32 %s16, 2
        // Predicated region
        $region49: #{tpu_custom_call.1} parent=47 // pred_check
          %p363 = pneg %p113
        $region50: #{tpu_custom_call.1} parent=47 // pred_check_branch
          %365 = sbr.rel (%p363) target = $region52
        $region51: #{tpu_custom_call.1} parent=47 // pred_region
          %s366 = sand.u32 %s98, 1
          %s367 = scalar_lea.sflag [#allocation4], %s366
          %s368 = sand.u32 %s98, 1
          %s369 = smul.addr %s368, 32
          %s370 = scalar_lea.vmem [#allocation7], %s369
          %371 = dma.done %s367, 512
        $region52: #{tpu_custom_call.1} parent=47 // pred_fallthru
          _
      $region48: #{tpu_custom_call.1} parent=5 // pred_fallthru
        _
    $region6: #{tpu_custom_call.1} parent=1 // loop_footer
      %s20 = sadd.s32 1, %s16
    $region7: #{tpu_custom_call.1} parent=1 // loop_footer_branch
      %15 = sbr.rel target = $region3
    $region8: #{tpu_custom_call.1} parent=1 // loop_exit
      _
    %372 = vsyncpa [#allocation3], 1
    %s373 = scalar_lea.sflag [#allocation3], 1
    %374 = vsyncpa %s373, 1
    %375 = vsyncpa [#allocation6], 1
    %376 = vsyncpa [#allocation4], 1
    %s377 = scalar_lea.sflag [#allocation4], 1
    %378 = vsyncpa %s377, 1

</llo_original>
